<compile_context>
chip_gen: v5e
topology: v5e:2x2
jax: 0.10.0
libtpu: 0.0.40
codegen_flags: <defaults>
</compile_context>

<pallas_src>
import jax
import jax.numpy as jnp
from jax.experimental import pallas as pl
from jax.experimental.pallas import tpu as pltpu


def _cond_kernel(x_ref, o_ref):
    x = x_ref[...]                                 # (1, n) tile in VMEM
    s = jnp.sum(x)                                 # scalar reduction
    # Both branches on one vreg are ~3 VALU ops total; cheaper than an
    # scf.if split and keeps a single unmasked store on the lane axis.
    o_ref[...] = jnp.where(s > 4.0, x * 3.0, x * x * x)


def ft_cond_dyn_shape(x):
    """x: 1-D float array of length n (small; static per-trace). Same shape out."""
    n = x.shape[0]
    x2 = x.reshape(1, n)                           # layout plumbing only
    out2 = pl.pallas_call(
        _cond_kernel,
        out_shape=jax.ShapeDtypeStruct((1, n), x.dtype),
        in_specs=[pl.BlockSpec(memory_space=pltpu.MemorySpace.VMEM)],
        out_specs=pl.BlockSpec(memory_space=pltpu.MemorySpace.VMEM),
    )(x2)
    return out2.reshape(n)


if __name__ == "__main__":
    key = jax.random.PRNGKey(0)
    # Matches module.get_random_inputs(): a length-5 uniform [0,1) vector
    # (upper bound is length 8; any small 1-D shape works).
    x = jax.random.uniform(key, (5,), dtype=jnp.float32)

    out = jax.block_until_ready(ft_cond_dyn_shape(x))

    # Pure-JAX reference for correctness check (false branch expected).
    ref = jnp.where(jnp.sum(x) > 4.0, x + x + x, x * x * x)
    assert out.shape == x.shape
    assert jnp.allclose(out, ref, atol=1e-6), (out, ref)

    # Exercise the other branch deterministically (sum > 4).
    x_big = x + 1.0
    out_big = jax.block_until_ready(ft_cond_dyn_shape(x_big))
    ref_big = jnp.where(jnp.sum(x_big) > 4.0, x_big + x_big + x_big, x_big ** 3)
    assert jnp.allclose(out_big, ref_big, atol=1e-6), (out_big, ref_big)

    # Also check the upper-bound shape (length 8).
    x8 = jax.random.uniform(jax.random.PRNGKey(1), (8,), dtype=jnp.float32)
    out8 = jax.block_until_ready(ft_cond_dyn_shape(x8))
    ref8 = jnp.where(jnp.sum(x8) > 4.0, x8 + x8 + x8, x8 * x8 * x8)
    assert jnp.allclose(out8, ref8, atol=1e-6), (out8, ref8)

    print("KERNEL_OK")
</pallas_src>

<mosaic_0001>
module attributes {stable_mosaic.version = 11 : i64} {
  func.func @_cond_kernel(%arg0: memref<1x5xf32, #tpu.memory_space<vmem>>, %arg1: memref<1x5xf32, #tpu.memory_space<vmem>>) attributes {dimension_semantics = [], scalar_prefetch = 0 : i64, scratch_operands = 0 : i64, tpu.core_type = #tpu.core_type<tc>} {
    %c0 = arith.constant 0 : index
    %c0_0 = arith.constant 0 : index
    %0 = vector.load %arg0[%c0, %c0_0] : memref<1x5xf32, #tpu.memory_space<vmem>>, vector<1x5xf32>
    %1 = vector.shape_cast %0 : vector<1x5xf32> to vector<1x1x5xf32>
    %cst = arith.constant dense<0.000000e+00> : vector<1xf32>
    %2 = vector.multi_reduction <add>, %1, %cst [1, 2] : vector<1x1x5xf32> to vector<1xf32>
    %3 = vector.shape_cast %2 : vector<1xf32> to vector<1x1x1xf32>
    %4 = vector.extract %3[0, 0, 0] : f32 from vector<1x1x1xf32>
    %cst_1 = arith.constant 4.000000e+00 : f32
    %5 = arith.cmpf ogt, %4, %cst_1 : f32
    %cst_2 = arith.constant 3.000000e+00 : f32
    %6 = vector.broadcast %cst_2 : f32 to vector<1x5xf32>
    %7 = arith.mulf %0, %6 : vector<1x5xf32>
    %8 = arith.mulf %0, %0 : vector<1x5xf32>
    %9 = arith.mulf %8, %0 : vector<1x5xf32>
    %10 = arith.select %5, %7, %9 : vector<1x5xf32>
    %c0_3 = arith.constant 0 : index
    %c0_4 = arith.constant 0 : index
    %11 = vector.load %arg1[%c0_3, %c0_4] : memref<1x5xf32, #tpu.memory_space<vmem>>, vector<1x5xf32>
    tpu.vector_store %arg1[%c0_3, %c0_4], %10 {strides = array<i32>} : memref<1x5xf32, #tpu.memory_space<vmem>>, vector<1x5xf32>,
    return
  }
}

</mosaic_0001>

<llo_original>
// kernel: tpu_custom_call.1
$region0: #{tpu_custom_call.1}
  #allocation0 [shape = 'u32[]', space=smem, size = 0x4, offset = 0x4, fixed_abs, tag = 'smem constant byte address 0x4 - core index']
  #allocation1 [shape = 'u32[72,128]{1,0:T(1,128)}', space=vmem, size = 0x9000, scoped, tag = 'internal scratch']
  %s0 = inlined_call_operand.hbm [shape: f32[1,5], index: 0, kind: input, shape index: {}]
  %s1 = inlined_call_operand.hbm [shape: f32[1,5], index: 1, kind: output, shape index: {}]
  %s2 = sld [smem:[#allocation0]]
  $region18: #{tpu_custom_call.1} parent=0
    _
  %s4 = ssub.s32 1, %s2
  %s5 = scalar_select 0, %s4, %s2
  $region1: #{tpu_custom_call.1} parent=0
    #allocation2 [shape = 'u8[512]{0}', space=vmem, size = 0x400, scoped, tag = 'input window, operand 0, single buffered']
    #allocation3 [shape = 's32[1]{0}', space=sflag, size = 0x4, scoped, tag = 'scoped memory for tpu_custom_call.1']
    #allocation4 [shape = 's32[1]{0}', space=sflag, size = 0x4, scoped, tag = 'scoped memory for tpu_custom_call.1']
    #allocation5 [shape = 'u8[512]{0}', space=vmem, size = 0x400, scoped, tag = 'output window, operand 0, single buffered']
    %6 = vsyncpa [#allocation3], 0
    %7 = vsyncpa [#allocation4], 0
    // Predicated region
    $region2: #{tpu_custom_call.1} parent=1 // pred_check
      _
    $region3: #{tpu_custom_call.1} parent=1 // pred_check_branch
      %9 = sbr.rel (0) target = $region5
    $region4: #{tpu_custom_call.1} parent=1 // pred_region
      %11 = vsyncadd [#allocation3], 0
      %s13 = sshll.u32 %s0, 4
      %s14 = int_to_ptr.hbm [resolvable:$true] %s13
      %s15 = sshll.u32 [#allocation2], 4
      %s16 = int_to_ptr.vmem [resolvable:$true] %s15
      %18 = dma.hbm_to_vmem [thread:$0]  %s14, 16, %s16, [#allocation3]
    $region5: #{tpu_custom_call.1} parent=1 // pred_fallthru
      _
    // Predicated region
    $region6: #{tpu_custom_call.1} parent=1 // pred_check
      _
    $region7: #{tpu_custom_call.1} parent=1 // pred_check_branch
      %20 = sbr.rel (0) target = $region9
    $region8: #{tpu_custom_call.1} parent=1 // pred_region
      %22 = dma.done [#allocation3], 16
    $region9: #{tpu_custom_call.1} parent=1 // pred_fallthru
      _
    %v23 = vld [vmem:[#allocation2] sm:$0x1]
    %vm24 = vcmask 32768
    %v25 = vsel %vm24, %v23, 0.0
    %26 = vadd.xlane.f32.xlu0 %v25
    %v27 = vpop.xlane.xlu0 %26
    %v28 = vrot.slane %v27, 4
    %v29 = vadd.f32 %v27, %v28
    %v30 = vrot.slane %v29, 2
    %v31 = vadd.f32 %v29, %v30
    %v32 = vrot.slane %v31, 1
    %v33 = vadd.f32 %v31, %v32
    %s34 = vtos %v33
    %p35 = scmp.gt.f32.partialorder %s34, 4.0
    %v36 = vmul.f32 %v23, 3.0
    %v37 = vmul.f32 %v23, %v23
    %v38 = vmul.f32 %v37, %v23
    %s39 = scalar_select %p35, 1, 0
    %v40 = vstv %s39
    %vm41 = vcmp.eq.s32.totalorder %v40, 1
    %v42 = vsel %vm41, %v36, %v38
    %43 = vst.msk [vmem:[#allocation5] sm:$0x1] %vm24, %v42
    // Predicated region
    $region10: #{tpu_custom_call.1} parent=1 // pred_check
      _
    $region11: #{tpu_custom_call.1} parent=1 // pred_check_branch
      %45 = sbr.rel (0) target = $region13
    $region12: #{tpu_custom_call.1} parent=1 // pred_region
      %47 = vsyncadd [#allocation4], 0
      %s49 = sshll.u32 [#allocation5], 4
      %s50 = int_to_ptr.vmem [resolvable:$true] %s49
      %s51 = sshll.u32 %s1, 4
      %s52 = int_to_ptr.hbm [resolvable:$true] %s51
      %54 = dma.vmem_to_hbm [thread:$0]  %s50, 16, %s52, [#allocation4]
    $region13: #{tpu_custom_call.1} parent=1 // pred_fallthru
      _
    // Predicated region
    $region14: #{tpu_custom_call.1} parent=1 // pred_check
      _
    $region15: #{tpu_custom_call.1} parent=1 // pred_check_branch
      %56 = sbr.rel (0) target = $region17
    $region16: #{tpu_custom_call.1} parent=1 // pred_region
      %58 = dma.done [#allocation4], 16
    $region17: #{tpu_custom_call.1} parent=1 // pred_fallthru
      _
    %59 = vsyncpa [#allocation3], 1
    %60 = vsyncpa [#allocation4], 1

</llo_original>
